<compile_context>
chip_gen: v5e
topology: v5e:2x2
jax: 0.10.0
libtpu: 0.0.40
codegen_flags: <defaults>
</compile_context>

<pallas_src>
import math
import jax
import jax.numpy as jnp
from jax.experimental import pallas as pl
from jax.experimental.pallas import tpu as pltpu

LEAKY_SLOPE = 0.01
BN_EPS = 1e-5
LANES = 128                    # every hidden activation is lane-dense at 128 lanes
HIDDEN = (100, 50, 25, 10)
N_CLASSES = 2


def query_classifier_kernel(x_ref, w1_ref, wstack_ref, pvec_ref, out_ref):
    """Fused forward pass.

    x_ref      : (B, input_size)    bf16
    w1_ref     : (input_size, 128)  bf16  W1^T zero-padded to 128 output lanes
    wstack_ref : (4, 128, 128)      bf16  W2^T..W4^T zero-padded; slab 3 holds the
                                           broadcast logit-difference column of W5
    pvec_ref   : (16, 128)          f32   rows 0..7 = g1,be1,...,g4,be4;
                                           row 8 = (b5[1]-b5[0]) broadcast
    out_ref    : (B, 128)           f32   p1 = P(class 1) replicated in all lanes
    """

    def bn_lrelu(z, layer):
        # BatchNorm1d training-mode forward (batch mean / biased variance),
        # folded into one per-feature scale/shift.  All stat math in f32.
        # Zero-padded lanes have gamma = beta = 0 and stay exactly zero.
        gamma = pvec_ref[2 * layer:2 * layer + 1, :]        # (1, 128) f32
        beta = pvec_ref[2 * layer + 1:2 * layer + 2, :]     # (1, 128) f32
        m = jnp.mean(z, axis=0, keepdims=True)              # (1, 128)
        ms = jnp.mean(z * z, axis=0, keepdims=True)         # (1, 128)
        var = jnp.maximum(ms - m * m, 0.0)                  # clamp: guard rsqrt
        scale = gamma * jax.lax.rsqrt(var + BN_EPS)
        shift = beta - m * scale
        zn = z * scale + shift
        # LeakyReLU(negative_slope=0.01)
        return jnp.where(zn > 0, zn, LEAKY_SLOPE * zn)

    # hid1..hid4.  bf16 operands into the MXU, f32 accumulation.  Linear biases
    # are omitted on purpose: a per-feature bias added immediately before
    # BatchNorm is cancelled exactly by the mean subtraction.
    z = jnp.dot(x_ref[...], w1_ref[...], preferred_element_type=jnp.float32)
    z = bn_lrelu(z, 0)
    for k in range(3):
        z = jnp.dot(z.astype(jnp.bfloat16), wstack_ref[k],
                    preferred_element_type=jnp.float32)
        z = bn_lrelu(z, k + 1)

    # Output head, folded to a single difference column broadcast across lanes:
    #   logits[:, j] = z[:, :10] @ (w5[1]-w5[0]) + (b5[1]-b5[0])   for every j.
    # softmax over 2 classes == sigmoid of the logit difference (exact identity).
    logits = jnp.dot(z.astype(jnp.bfloat16), wstack_ref[3],
                     preferred_element_type=jnp.float32)
    logits = logits + pvec_ref[8:9, :]
    p1 = jax.nn.sigmoid(logits)                             # (B, 128), all lanes equal

    # Single unmasked lane-dense store.  The wrapper reads lane 0 and derives p0.
    # TODO(synk): for the batch-tiled version, pack batch into lanes instead to
    # avoid the 128x output write amplification at large B.
    out_ref[...] = p1


def _pad_to(a, rows, cols, dtype=jnp.float32):
    out = jnp.zeros((rows, cols), jnp.float32)
    out = out.at[: a.shape[0], : a.shape[1]].set(a.astype(jnp.float32))
    return out.astype(dtype)


def init_params(key, input_size):
    """Deterministic params matching the PyTorch __init__ shapes.

    Linear weights: kaiming_uniform_(nonlinearity='leaky_relu'), biases zero.
    BatchNorm1d: gamma=1, beta=0.
    """
    dims = [input_size, *HIDDEN, N_CLASSES]
    gain = math.sqrt(2.0 / (1.0 + LEAKY_SLOPE ** 2))
    params = []
    keys = jax.random.split(key, len(dims) - 1)
    for i in range(len(dims) - 1):
        fan_in, fan_out = dims[i], dims[i + 1]
        bound = gain * math.sqrt(3.0 / fan_in)
        w = jax.random.uniform(keys[i], (fan_out, fan_in), jnp.float32, -bound, bound)
        b = jnp.zeros((fan_out,), jnp.float32)
        if i < 4:  # hidden layers have BatchNorm
            gamma = jnp.ones((fan_out,), jnp.float32)
            beta = jnp.zeros((fan_out,), jnp.float32)
            params.append((w, b, gamma, beta))
        else:
            params.append((w, b))
    return params


def query_classifier_forward(x, params):
    batch, input_size = x.shape

    # ---- pack parameters into a handful of lane-dense VMEM inputs ----------
    # Matmul operands in bf16 (MXU-native), per-feature scale/shift/bias in f32.
    w1 = params[0][0]
    w1_p = _pad_to(w1.T, input_size, LANES, jnp.bfloat16)     # (input_size, 128)

    wstack = []
    for layer in params[1:4]:
        wstack.append(_pad_to(layer[0].T, LANES, LANES, jnp.bfloat16))
    w5, b5 = params[4]
    # Folded 2-class head: one difference column broadcast across all 128 lanes.
    w5_diff = (w5[1] - w5[0]).reshape(-1, 1)                  # (10, 1)
    w5_slab = jnp.zeros((LANES, LANES), jnp.float32)
    w5_slab = w5_slab.at[: w5_diff.shape[0], :].set(
        jnp.broadcast_to(w5_diff, (w5_diff.shape[0], LANES)))
    wstack.append(w5_slab.astype(jnp.bfloat16))
    wstack = jnp.stack(wstack, axis=0)                        # (4, 128, 128) bf16

    rows = []
    for layer in params[:4]:
        _w, _b, g, be = layer
        rows.append(_pad_to(g.reshape(1, -1), 1, LANES))
        rows.append(_pad_to(be.reshape(1, -1), 1, LANES))
    b5_diff = jnp.full((1, LANES), b5[1] - b5[0], jnp.float32)
    rows.append(b5_diff)                                      # row 8 = bias difference
    pvec = jnp.concatenate(
        rows + [jnp.zeros((16 - len(rows), LANES), jnp.float32)], axis=0
    )                                                         # (16, 128) f32

    x_bf = x.astype(jnp.bfloat16)

    # ---- advisory cost estimate + right-sized VMEM limit --------------------
    dims = (input_size, *HIDDEN, N_CLASSES)
    flops = 2 * batch * sum(dims[i] * dims[i + 1] for i in range(5))
    flops += 8 * batch * sum(HIDDEN)                          # BN + LeakyReLU elementwise
    transcendentals = batch * LANES + 4 * LANES               # sigmoid exps + rsqrts
    buffer_bytes = (
        x_bf.size * 2 + w1_p.size * 2 + wstack.size * 2       # bf16 inputs
        + pvec.size * 4                                       # f32 per-feature tile
        + batch * LANES * 4                                   # f32 output slab
        + 4 * batch * LANES * 4                               # activation headroom
    )
    vmem_limit = max(2 * 1024 * 1024, 2 * int(buffer_bytes))  # small, with headroom
    bytes_accessed = (x_bf.size + w1_p.size + wstack.size) * 2 + pvec.size * 4 \
        + batch * LANES * 4

    vmem_spec = pl.BlockSpec(memory_space=pltpu.MemorySpace.VMEM)
    out_padded = pl.pallas_call(
        query_classifier_kernel,
        out_shape=jax.ShapeDtypeStruct((batch, LANES), jnp.float32),
        in_specs=[vmem_spec] * 4,
        out_specs=vmem_spec,
        compiler_params=pltpu.CompilerParams(vmem_limit_bytes=vmem_limit),
        cost_estimate=pl.CostEstimate(
            flops=int(flops),
            transcendentals=int(transcendentals),
            bytes_accessed=int(bytes_accessed),
        ),
    )(x_bf, w1_p, wstack, pvec)

    p1 = out_padded[:, 0:1]                                   # (B, 1)
    p0 = 1.0 - p1
    return jnp.concatenate([p0, p1], axis=1)                  # (B, 2)


def reference_forward(x, params):
    """Pure-JAX f32 reference matching the PyTorch module (training-mode BN)."""
    z = x.astype(jnp.float32)
    for (w, b, g, be) in params[:4]:
        z = z @ w.T + b
        m = jnp.mean(z, axis=0, keepdims=True)
        v = jnp.mean((z - m) ** 2, axis=0, keepdims=True)
        z = (z - m) / jnp.sqrt(v + BN_EPS) * g + be
        z = jnp.where(z > 0, z, LEAKY_SLOPE * z)
    w5, b5 = params[4]
    logits = z @ w5.T + b5
    return jax.nn.softmax(logits, axis=1)


if __name__ == "__main__":
    INPUT_SIZE = 32
    BATCH = 8

    key = jax.random.PRNGKey(0)
    k_x, k_p = jax.random.split(key)
    x = jax.random.normal(k_x, (BATCH, INPUT_SIZE), jnp.float32)
    params = init_params(k_p, INPUT_SIZE)

    out = query_classifier_forward(x, params)
    jax.block_until_ready(out)

    ref = reference_forward(x, params)

    assert out.shape == (BATCH, N_CLASSES)
    assert bool(jnp.all(jnp.isfinite(out)))
    # softmax rows sum to 1 (exact by construction: p0 = 1 - p1)
    assert bool(jnp.allclose(jnp.sum(out, axis=1), 1.0, atol=1e-6))
    # matches the pure-f32 reference of the PyTorch module (bf16 MXU operands
    # introduce ~1e-3..1e-2 absolute deviation on the probabilities)
    assert bool(jnp.allclose(out, ref, atol=3e-2, rtol=3e-2))
    print("KERNEL_OK")
</pallas_src>

<mosaic_0001>
module attributes {stable_mosaic.version = 11 : i64} {
  func.func @query_classifier_kernel(%arg0: memref<8x32xbf16, #tpu.memory_space<vmem>>, %arg1: memref<32x128xbf16, #tpu.memory_space<vmem>>, %arg2: memref<4x128x128xbf16, #tpu.memory_space<vmem>>, %arg3: memref<16x128xf32, #tpu.memory_space<vmem>>, %arg4: memref<8x128xf32, #tpu.memory_space<vmem>>) attributes {dimension_semantics = [], scalar_prefetch = 0 : i64, scratch_operands = 0 : i64, tpu.core_type = #tpu.core_type<tc>} {
    %c0 = arith.constant 0 : index
    %c0_0 = arith.constant 0 : index
    %0 = vector.load %arg0[%c0, %c0_0] : memref<8x32xbf16, #tpu.memory_space<vmem>>, vector<8x32xbf16>
    %c0_1 = arith.constant 0 : index
    %c0_2 = arith.constant 0 : index
    %1 = vector.load %arg1[%c0_1, %c0_2] : memref<32x128xbf16, #tpu.memory_space<vmem>>, vector<32x128xbf16>
    %cst = arith.constant dense<0.000000e+00> : vector<8x128xf32>
    %2 = tpu.matmul %0, %1, %cst {dimension_numbers = #tpu.dot_dimension_numbers<[1], [0], [0], [1], [0, 0, 1, 1], [], []>} : vector<8x32xbf16>, vector<32x128xbf16>, vector<8x128xf32> -> vector<8x128xf32>
    %c0_3 = arith.constant 0 : index
    %c0_4 = arith.constant 0 : index
    %3 = vector.load %arg3[%c0_3, %c0_4] : memref<16x128xf32, #tpu.memory_space<vmem>>, vector<1x128xf32>
    %c1 = arith.constant 1 : index
    %c0_5 = arith.constant 0 : index
    %4 = vector.load %arg3[%c1, %c0_5] : memref<16x128xf32, #tpu.memory_space<vmem>>, vector<1x128xf32>
    %cst_6 = arith.constant dense<0.000000e+00> : vector<128xf32>
    %5 = vector.multi_reduction <add>, %2, %cst_6 [0] : vector<8x128xf32> to vector<128xf32>
    %6 = vector.shape_cast %5 : vector<128xf32> to vector<1x128xf32>
    %cst_7 = arith.constant 8.000000e+00 : f32
    %7 = vector.broadcast %cst_7 : f32 to vector<1x128xf32>
    %8 = arith.divf %6, %7 : vector<1x128xf32>
    %9 = arith.mulf %2, %2 : vector<8x128xf32>
    %cst_8 = arith.constant dense<0.000000e+00> : vector<128xf32>
    %10 = vector.multi_reduction <add>, %9, %cst_8 [0] : vector<8x128xf32> to vector<128xf32>
    %11 = vector.shape_cast %10 : vector<128xf32> to vector<1x128xf32>
    %cst_9 = arith.constant 8.000000e+00 : f32
    %12 = vector.broadcast %cst_9 : f32 to vector<1x128xf32>
    %13 = arith.divf %11, %12 : vector<1x128xf32>
    %14 = arith.mulf %8, %8 : vector<1x128xf32>
    %15 = arith.subf %13, %14 : vector<1x128xf32>
    %cst_10 = arith.constant 0.000000e+00 : f32
    %16 = vector.broadcast %cst_10 : f32 to vector<1x128xf32>
    %17 = arith.maximumf %15, %16 : vector<1x128xf32>
    %cst_11 = arith.constant 9.99999974E-6 : f32
    %18 = vector.broadcast %cst_11 : f32 to vector<1x128xf32>
    %19 = arith.addf %17, %18 : vector<1x128xf32>
    %20 = math.rsqrt %19 : vector<1x128xf32>
    %21 = arith.mulf %3, %20 : vector<1x128xf32>
    %22 = arith.mulf %8, %21 : vector<1x128xf32>
    %23 = arith.subf %4, %22 : vector<1x128xf32>
    %24 = vector.broadcast %21 : vector<1x128xf32> to vector<8x128xf32>
    %25 = arith.mulf %2, %24 : vector<8x128xf32>
    %26 = vector.broadcast %23 : vector<1x128xf32> to vector<8x128xf32>
    %27 = arith.addf %25, %26 : vector<8x128xf32>
    %cst_12 = arith.constant 0.000000e+00 : f32
    %28 = vector.broadcast %cst_12 : f32 to vector<8x128xf32>
    %29 = arith.cmpf ogt, %27, %28 : vector<8x128xf32>
    %cst_13 = arith.constant 0.00999999977 : f32
    %30 = vector.broadcast %cst_13 : f32 to vector<8x128xf32>
    %31 = arith.mulf %30, %27 : vector<8x128xf32>
    %32 = arith.select %29, %27, %31 : vector<8x128xi1>, vector<8x128xf32>
    %33 = arith.truncf %32 : vector<8x128xf32> to vector<8x128xbf16>
    %c0_14 = arith.constant 0 : index
    %c0_15 = arith.constant 0 : index
    %c0_16 = arith.constant 0 : index
    %34 = vector.load %arg2[%c0_14, %c0_15, %c0_16] : memref<4x128x128xbf16, #tpu.memory_space<vmem>>, vector<1x128x128xbf16>
    %35 = vector.shape_cast %34 : vector<1x128x128xbf16> to vector<128x128xbf16>
    %cst_17 = arith.constant dense<0.000000e+00> : vector<8x128xf32>
    %36 = tpu.matmul %33, %35, %cst_17 {dimension_numbers = #tpu.dot_dimension_numbers<[1], [0], [0], [1], [0, 0, 1, 1], [], []>} : vector<8x128xbf16>, vector<128x128xbf16>, vector<8x128xf32> -> vector<8x128xf32>
    %c2 = arith.constant 2 : index
    %c0_18 = arith.constant 0 : index
    %37 = vector.load %arg3[%c2, %c0_18] : memref<16x128xf32, #tpu.memory_space<vmem>>, vector<1x128xf32>
    %c3 = arith.constant 3 : index
    %c0_19 = arith.constant 0 : index
    %38 = vector.load %arg3[%c3, %c0_19] : memref<16x128xf32, #tpu.memory_space<vmem>>, vector<1x128xf32>
    %cst_20 = arith.constant dense<0.000000e+00> : vector<128xf32>
    %39 = vector.multi_reduction <add>, %36, %cst_20 [0] : vector<8x128xf32> to vector<128xf32>
    %40 = vector.shape_cast %39 : vector<128xf32> to vector<1x128xf32>
    %cst_21 = arith.constant 8.000000e+00 : f32
    %41 = vector.broadcast %cst_21 : f32 to vector<1x128xf32>
    %42 = arith.divf %40, %41 : vector<1x128xf32>
    %43 = arith.mulf %36, %36 : vector<8x128xf32>
    %cst_22 = arith.constant dense<0.000000e+00> : vector<128xf32>
    %44 = vector.multi_reduction <add>, %43, %cst_22 [0] : vector<8x128xf32> to vector<128xf32>
    %45 = vector.shape_cast %44 : vector<128xf32> to vector<1x128xf32>
    %cst_23 = arith.constant 8.000000e+00 : f32
    %46 = vector.broadcast %cst_23 : f32 to vector<1x128xf32>
    %47 = arith.divf %45, %46 : vector<1x128xf32>
    %48 = arith.mulf %42, %42 : vector<1x128xf32>
    %49 = arith.subf %47, %48 : vector<1x128xf32>
    %cst_24 = arith.constant 0.000000e+00 : f32
    %50 = vector.broadcast %cst_24 : f32 to vector<1x128xf32>
    %51 = arith.maximumf %49, %50 : vector<1x128xf32>
    %cst_25 = arith.constant 9.99999974E-6 : f32
    %52 = vector.broadcast %cst_25 : f32 to vector<1x128xf32>
    %53 = arith.addf %51, %52 : vector<1x128xf32>
    %54 = math.rsqrt %53 : vector<1x128xf32>
    %55 = arith.mulf %37, %54 : vector<1x128xf32>
    %56 = arith.mulf %42, %55 : vector<1x128xf32>
    %57 = arith.subf %38, %56 : vector<1x128xf32>
    %58 = vector.broadcast %55 : vector<1x128xf32> to vector<8x128xf32>
    %59 = arith.mulf %36, %58 : vector<8x128xf32>
    %60 = vector.broadcast %57 : vector<1x128xf32> to vector<8x128xf32>
    %61 = arith.addf %59, %60 : vector<8x128xf32>
    %cst_26 = arith.constant 0.000000e+00 : f32
    %62 = vector.broadcast %cst_26 : f32 to vector<8x128xf32>
    %63 = arith.cmpf ogt, %61, %62 : vector<8x128xf32>
    %cst_27 = arith.constant 0.00999999977 : f32
    %64 = vector.broadcast %cst_27 : f32 to vector<8x128xf32>
    %65 = arith.mulf %64, %61 : vector<8x128xf32>
    %66 = arith.select %63, %61, %65 : vector<8x128xi1>, vector<8x128xf32>
    %67 = arith.truncf %66 : vector<8x128xf32> to vector<8x128xbf16>
    %c1_28 = arith.constant 1 : index
    %c0_29 = arith.constant 0 : index
    %c0_30 = arith.constant 0 : index
    %68 = vector.load %arg2[%c1_28, %c0_29, %c0_30] : memref<4x128x128xbf16, #tpu.memory_space<vmem>>, vector<1x128x128xbf16>
    %69 = vector.shape_cast %68 : vector<1x128x128xbf16> to vector<128x128xbf16>
    %cst_31 = arith.constant dense<0.000000e+00> : vector<8x128xf32>
    %70 = tpu.matmul %67, %69, %cst_31 {dimension_numbers = #tpu.dot_dimension_numbers<[1], [0], [0], [1], [0, 0, 1, 1], [], []>} : vector<8x128xbf16>, vector<128x128xbf16>, vector<8x128xf32> -> vector<8x128xf32>
    %c4 = arith.constant 4 : index
    %c0_32 = arith.constant 0 : index
    %71 = vector.load %arg3[%c4, %c0_32] : memref<16x128xf32, #tpu.memory_space<vmem>>, vector<1x128xf32>
    %c5 = arith.constant 5 : index
    %c0_33 = arith.constant 0 : index
    %72 = vector.load %arg3[%c5, %c0_33] : memref<16x128xf32, #tpu.memory_space<vmem>>, vector<1x128xf32>
    %cst_34 = arith.constant dense<0.000000e+00> : vector<128xf32>
    %73 = vector.multi_reduction <add>, %70, %cst_34 [0] : vector<8x128xf32> to vector<128xf32>
    %74 = vector.shape_cast %73 : vector<128xf32> to vector<1x128xf32>
    %cst_35 = arith.constant 8.000000e+00 : f32
    %75 = vector.broadcast %cst_35 : f32 to vector<1x128xf32>
    %76 = arith.divf %74, %75 : vector<1x128xf32>
    %77 = arith.mulf %70, %70 : vector<8x128xf32>
    %cst_36 = arith.constant dense<0.000000e+00> : vector<128xf32>
    %78 = vector.multi_reduction <add>, %77, %cst_36 [0] : vector<8x128xf32> to vector<128xf32>
    %79 = vector.shape_cast %78 : vector<128xf32> to vector<1x128xf32>
    %cst_37 = arith.constant 8.000000e+00 : f32
    %80 = vector.broadcast %cst_37 : f32 to vector<1x128xf32>
    %81 = arith.divf %79, %80 : vector<1x128xf32>
    %82 = arith.mulf %76, %76 : vector<1x128xf32>
    %83 = arith.subf %81, %82 : vector<1x128xf32>
    %cst_38 = arith.constant 0.000000e+00 : f32
    %84 = vector.broadcast %cst_38 : f32 to vector<1x128xf32>
    %85 = arith.maximumf %83, %84 : vector<1x128xf32>
    %cst_39 = arith.constant 9.99999974E-6 : f32
    %86 = vector.broadcast %cst_39 : f32 to vector<1x128xf32>
    %87 = arith.addf %85, %86 : vector<1x128xf32>
    %88 = math.rsqrt %87 : vector<1x128xf32>
    %89 = arith.mulf %71, %88 : vector<1x128xf32>
    %90 = arith.mulf %76, %89 : vector<1x128xf32>
    %91 = arith.subf %72, %90 : vector<1x128xf32>
    %92 = vector.broadcast %89 : vector<1x128xf32> to vector<8x128xf32>
    %93 = arith.mulf %70, %92 : vector<8x128xf32>
    %94 = vector.broadcast %91 : vector<1x128xf32> to vector<8x128xf32>
    %95 = arith.addf %93, %94 : vector<8x128xf32>
    %cst_40 = arith.constant 0.000000e+00 : f32
    %96 = vector.broadcast %cst_40 : f32 to vector<8x128xf32>
    %97 = arith.cmpf ogt, %95, %96 : vector<8x128xf32>
    %cst_41 = arith.constant 0.00999999977 : f32
    %98 = vector.broadcast %cst_41 : f32 to vector<8x128xf32>
    %99 = arith.mulf %98, %95 : vector<8x128xf32>
    %100 = arith.select %97, %95, %99 : vector<8x128xi1>, vector<8x128xf32>
    %101 = arith.truncf %100 : vector<8x128xf32> to vector<8x128xbf16>
    %c2_42 = arith.constant 2 : index
    %c0_43 = arith.constant 0 : index
    %c0_44 = arith.constant 0 : index
    %102 = vector.load %arg2[%c2_42, %c0_43, %c0_44] : memref<4x128x128xbf16, #tpu.memory_space<vmem>>, vector<1x128x128xbf16>
    %103 = vector.shape_cast %102 : vector<1x128x128xbf16> to vector<128x128xbf16>
    %cst_45 = arith.constant dense<0.000000e+00> : vector<8x128xf32>
    %104 = tpu.matmul %101, %103, %cst_45 {dimension_numbers = #tpu.dot_dimension_numbers<[1], [0], [0], [1], [0, 0, 1, 1], [], []>} : vector<8x128xbf16>, vector<128x128xbf16>, vector<8x128xf32> -> vector<8x128xf32>
    %c6 = arith.constant 6 : index
    %c0_46 = arith.constant 0 : index
    %105 = vector.load %arg3[%c6, %c0_46] : memref<16x128xf32, #tpu.memory_space<vmem>>, vector<1x128xf32>
    %c7 = arith.constant 7 : index
    %c0_47 = arith.constant 0 : index
    %106 = vector.load %arg3[%c7, %c0_47] : memref<16x128xf32, #tpu.memory_space<vmem>>, vector<1x128xf32>
    %cst_48 = arith.constant dense<0.000000e+00> : vector<128xf32>
    %107 = vector.multi_reduction <add>, %104, %cst_48 [0] : vector<8x128xf32> to vector<128xf32>
    %108 = vector.shape_cast %107 : vector<128xf32> to vector<1x128xf32>
    %cst_49 = arith.constant 8.000000e+00 : f32
    %109 = vector.broadcast %cst_49 : f32 to vector<1x128xf32>
    %110 = arith.divf %108, %109 : vector<1x128xf32>
    %111 = arith.mulf %104, %104 : vector<8x128xf32>
    %cst_50 = arith.constant dense<0.000000e+00> : vector<128xf32>
    %112 = vector.multi_reduction <add>, %111, %cst_50 [0] : vector<8x128xf32> to vector<128xf32>
    %113 = vector.shape_cast %112 : vector<128xf32> to vector<1x128xf32>
    %cst_51 = arith.constant 8.000000e+00 : f32
    %114 = vector.broadcast %cst_51 : f32 to vector<1x128xf32>
    %115 = arith.divf %113, %114 : vector<1x128xf32>
    %116 = arith.mulf %110, %110 : vector<1x128xf32>
    %117 = arith.subf %115, %116 : vector<1x128xf32>
    %cst_52 = arith.constant 0.000000e+00 : f32
    %118 = vector.broadcast %cst_52 : f32 to vector<1x128xf32>
    %119 = arith.maximumf %117, %118 : vector<1x128xf32>
    %cst_53 = arith.constant 9.99999974E-6 : f32
    %120 = vector.broadcast %cst_53 : f32 to vector<1x128xf32>
    %121 = arith.addf %119, %120 : vector<1x128xf32>
    %122 = math.rsqrt %121 : vector<1x128xf32>
    %123 = arith.mulf %105, %122 : vector<1x128xf32>
    %124 = arith.mulf %110, %123 : vector<1x128xf32>
    %125 = arith.subf %106, %124 : vector<1x128xf32>
    %126 = vector.broadcast %123 : vector<1x128xf32> to vector<8x128xf32>
    %127 = arith.mulf %104, %126 : vector<8x128xf32>
    %128 = vector.broadcast %125 : vector<1x128xf32> to vector<8x128xf32>
    %129 = arith.addf %127, %128 : vector<8x128xf32>
    %cst_54 = arith.constant 0.000000e+00 : f32
    %130 = vector.broadcast %cst_54 : f32 to vector<8x128xf32>
    %131 = arith.cmpf ogt, %129, %130 : vector<8x128xf32>
    %cst_55 = arith.constant 0.00999999977 : f32
    %132 = vector.broadcast %cst_55 : f32 to vector<8x128xf32>
    %133 = arith.mulf %132, %129 : vector<8x128xf32>
    %134 = arith.select %131, %129, %133 : vector<8x128xi1>, vector<8x128xf32>
    %135 = arith.truncf %134 : vector<8x128xf32> to vector<8x128xbf16>
    %c3_56 = arith.constant 3 : index
    %c0_57 = arith.constant 0 : index
    %c0_58 = arith.constant 0 : index
    %136 = vector.load %arg2[%c3_56, %c0_57, %c0_58] : memref<4x128x128xbf16, #tpu.memory_space<vmem>>, vector<1x128x128xbf16>
    %137 = vector.shape_cast %136 : vector<1x128x128xbf16> to vector<128x128xbf16>
    %cst_59 = arith.constant dense<0.000000e+00> : vector<8x128xf32>
    %138 = tpu.matmul %135, %137, %cst_59 {dimension_numbers = #tpu.dot_dimension_numbers<[1], [0], [0], [1], [0, 0, 1, 1], [], []>} : vector<8x128xbf16>, vector<128x128xbf16>, vector<8x128xf32> -> vector<8x128xf32>
    %c8 = arith.constant 8 : index
    %c0_60 = arith.constant 0 : index
    %139 = vector.load %arg3[%c8, %c0_60] : memref<16x128xf32, #tpu.memory_space<vmem>>, vector<1x128xf32>
    %140 = vector.broadcast %139 : vector<1x128xf32> to vector<8x128xf32>
    %141 = arith.addf %138, %140 : vector<8x128xf32>
    %142 = arith.negf %141 : vector<8x128xf32>
    %143 = math.exp %142 : vector<8x128xf32>
    %cst_61 = arith.constant 1.000000e+00 : f32
    %144 = vector.broadcast %cst_61 : f32 to vector<8x128xf32>
    %145 = arith.addf %144, %143 : vector<8x128xf32>
    %146 = arith.divf %144, %145 : vector<8x128xf32>
    %c0_62 = arith.constant 0 : index
    %c0_63 = arith.constant 0 : index
    %147 = vector.load %arg4[%c0_62, %c0_63] : memref<8x128xf32, #tpu.memory_space<vmem>>, vector<8x128xf32>
    tpu.vector_store %arg4[%c0_62, %c0_63], %146 {strides = array<i32>} : memref<8x128xf32, #tpu.memory_space<vmem>>, vector<8x128xf32>,
    return
  }
}

</mosaic_0001>

<llo_original>
// kernel: tpu_custom_call.1
$region0: #{tpu_custom_call.1}
  #allocation0 [shape = 'u32[]', space=smem, size = 0x4, offset = 0x4, fixed_abs, tag = 'smem constant byte address 0x4 - core index']
  #allocation1 [shape = 'u32[72,128]{1,0:T(1,128)}', space=vmem, size = 0x9000, scoped, tag = 'internal scratch']
  %s0 = inlined_call_operand.hbm [shape: bf16[8,32], index: 0, kind: input, shape index: {}]
  %s1 = inlined_call_operand.hbm [shape: bf16[32,128], index: 1, kind: input, shape index: {}]
  %s2 = inlined_call_operand.hbm [shape: bf16[4,128,128], index: 2, kind: input, shape index: {}]
  %s3 = inlined_call_operand.hbm [shape: f32[16,128], index: 3, kind: input, shape index: {}]
  %s4 = inlined_call_operand.hbm [shape: f32[8,128], index: 4, kind: output, shape index: {}]
  %s5 = sld [smem:[#allocation0]]
  $region42: #{tpu_custom_call.1} parent=0
    _
  %s7 = ssub.s32 1, %s5
  %s8 = scalar_select 0, %s7, %s5
  $region1: #{tpu_custom_call.1} parent=0
    #allocation2 [shape = 'u8[2048]{0}', space=vmem, size = 0x800, scoped, tag = 'input window, operand 0, single buffered']
    #allocation3 [shape = 's32[1]{0}', space=sflag, size = 0x4, scoped, tag = 'scoped memory for tpu_custom_call.1']
    #allocation4 [shape = 's32[1]{0}', space=sflag, size = 0x4, scoped, tag = 'scoped memory for tpu_custom_call.1']
    #allocation5 [shape = 'u8[8192]{0}', space=vmem, size = 0x2000, scoped, tag = 'input window, operand 1, single buffered']
    #allocation6 [shape = 's32[1]{0}', space=sflag, size = 0x4, scoped, tag = 'scoped memory for tpu_custom_call.1']
    #allocation7 [shape = 'u8[131072]{0}', space=vmem, size = 0x20000, scoped, tag = 'input window, operand 2, single buffered']
    #allocation8 [shape = 'u8[8192]{0}', space=vmem, size = 0x2000, scoped, tag = 'input window, operand 3, single buffered']
    #allocation9 [shape = 's32[1]{0}', space=sflag, size = 0x4, scoped, tag = 'scoped memory for tpu_custom_call.1']
    #allocation10 [shape = 'u8[4096]{0}', space=vmem, size = 0x1000, scoped, tag = 'output window, operand 0, single buffered']
    %9 = vsyncpa [#allocation3], 0
    %10 = vsyncpa [#allocation6], 0
    %11 = vsyncpa [#allocation9], 0
    %12 = vsyncpa [#allocation4], 0
    // Predicated region
    $region2: #{tpu_custom_call.1} parent=1 // pred_check
      _
    $region3: #{tpu_custom_call.1} parent=1 // pred_check_branch
      %14 = sbr.rel (0) target = $region5
    $region4: #{tpu_custom_call.1} parent=1 // pred_region
      %16 = vsyncadd [#allocation3], 0
      %s18 = sshll.u32 %s0, 4
      %s19 = int_to_ptr.hbm [resolvable:$true] %s18
      %s20 = sshll.u32 [#allocation2], 4
      %s21 = int_to_ptr.vmem [resolvable:$true] %s20
      %23 = dma.hbm_to_vmem [thread:$0]  %s19, 64, %s21, [#allocation3]
    $region5: #{tpu_custom_call.1} parent=1 // pred_fallthru
      _
    // Predicated region
    $region6: #{tpu_custom_call.1} parent=1 // pred_check
      _
    $region7: #{tpu_custom_call.1} parent=1 // pred_check_branch
      %25 = sbr.rel (0) target = $region9
    $region8: #{tpu_custom_call.1} parent=1 // pred_region
      %27 = vsyncadd [#allocation6], 0
      %s28 = sshll.u32 %s1, 4
      %s29 = int_to_ptr.hbm [resolvable:$true] %s28
      %s30 = sshll.u32 [#allocation5], 4
      %s31 = int_to_ptr.vmem [resolvable:$true] %s30
      %36 = dma.hbm_to_vmem [thread:$0]  %s29, 256, %s31, [#allocation6], 64, 64, 4
    $region9: #{tpu_custom_call.1} parent=1 // pred_fallthru
      _
    // Predicated region
    $region10: #{tpu_custom_call.1} parent=1 // pred_check
      _
    $region11: #{tpu_custom_call.1} parent=1 // pred_check_branch
      %38 = sbr.rel (0) target = $region13
    $region12: #{tpu_custom_call.1} parent=1 // pred_region
      %40 = vsyncadd [#allocation6], 0
      %s41 = sshll.u32 %s2, 4
      %s42 = int_to_ptr.hbm [resolvable:$true] %s41
      %s43 = sshll.u32 [#allocation7], 4
      %s44 = int_to_ptr.vmem [resolvable:$true] %s43
      %49 = dma.hbm_to_vmem [thread:$0]  %s42, 4096, %s44, [#allocation6], 64, 64, 4
    $region13: #{tpu_custom_call.1} parent=1 // pred_fallthru
      _
    // Predicated region
    $region14: #{tpu_custom_call.1} parent=1 // pred_check
      _
    $region15: #{tpu_custom_call.1} parent=1 // pred_check_branch
      %51 = sbr.rel (0) target = $region17
    $region16: #{tpu_custom_call.1} parent=1 // pred_region
      %53 = vsyncadd [#allocation9], 0
      %s54 = sshll.u32 %s3, 4
      %s55 = int_to_ptr.hbm [resolvable:$true] %s54
      %s56 = sshll.u32 [#allocation8], 4
      %s57 = int_to_ptr.vmem [resolvable:$true] %s56
      %62 = dma.hbm_to_vmem [thread:$0]  %s55, 256, %s57, [#allocation9], 128, 128, 8
    $region17: #{tpu_custom_call.1} parent=1 // pred_fallthru
      _
    // Predicated region
    $region18: #{tpu_custom_call.1} parent=1 // pred_check
      _
    $region19: #{tpu_custom_call.1} parent=1 // pred_check_branch
      %64 = sbr.rel (0) target = $region21
    $region20: #{tpu_custom_call.1} parent=1 // pred_region
      %66 = dma.done [#allocation3], 64
    $region21: #{tpu_custom_call.1} parent=1 // pred_fallthru
      _
    // Predicated region
    $region22: #{tpu_custom_call.1} parent=1 // pred_check
      _
    $region23: #{tpu_custom_call.1} parent=1 // pred_check_branch
      %68 = sbr.rel (0) target = $region25
    $region24: #{tpu_custom_call.1} parent=1 // pred_region
      %70 = dma.done [#allocation6], 256
    $region25: #{tpu_custom_call.1} parent=1 // pred_fallthru
      _
    // Predicated region
    $region26: #{tpu_custom_call.1} parent=1 // pred_check
      _
    $region27: #{tpu_custom_call.1} parent=1 // pred_check_branch
      %72 = sbr.rel (0) target = $region29
    $region28: #{tpu_custom_call.1} parent=1 // pred_region
      %74 = dma.done [#allocation6], 4096
    $region29: #{tpu_custom_call.1} parent=1 // pred_fallthru
      _
    // Predicated region
    $region30: #{tpu_custom_call.1} parent=1 // pred_check
      _
    $region31: #{tpu_custom_call.1} parent=1 // pred_check_branch
      %76 = sbr.rel (0) target = $region33
    $region32: #{tpu_custom_call.1} parent=1 // pred_region
      %78 = dma.done [#allocation9], 256
    $region33: #{tpu_custom_call.1} parent=1 // pred_fallthru
      _
    %v80 = vld [vmem:[#allocation2] sm:$0xf]
    %v81 = vld [vmem:[#allocation5] sm:$0xf]
    %v82 = vld [vmem:[#allocation5 + $0x4] sm:$0xf]
    %v83 = vld [vmem:[#allocation5 + $0x8] sm:$0xf]
    %v84 = vld [vmem:[#allocation5 + $0xc] sm:$0xf]
    %v89 = vunpack.c.l.b16 %v81
    %v90 = vunpack.c.l.b16 %v82
    %v91 = vunpack.c.l.b16 %v83
    %v92 = vunpack.c.l.b16 %v84
    %v93 = vpack.c.b16 %v90, %v89
    %v94 = vpack.c.b16 %v92, %v91
    %vm97 = vcmask 261120
    %v99 = vsel %vm97, %v80, 0
    %101 = vmatpush.bf16.msra.mxu0 0
    %102 = vmatpush.bf16.msra.mxu0 0
    %103 = vmatpush.bf16.msra.mxu0 0
    %104 = vmatpush.bf16.msra.mxu0 0
    %105 = vmatpush.bf16.msra.mxu0 0
    %106 = vmatpush.bf16.msra.mxu0 0
    %107 = vmatpush.bf16.msra.mxu0 %v94
    %108 = vmatpush.bf16.msra.mxu0 %v93
    %109 = vmatmul.bf16.gmra.mxu0 %v99
    %v110 = vpop.f32.mrf.mxu0
    %v111 = vadd.f32 0.0, %v110
    %v112 = vpop.f32.mrf.mxu0
    %113 = vdwg.mxu0
    %v114 = vld [vmem:[#allocation8] sm:$0x1]
    %v115 = vld [vmem:[#allocation8 + $0x1] sm:$0x1]
    %v116 = vrot.slane %v111, 4
    %v117 = vadd.f32 %v111, %v116
    %v118 = vrot.slane %v117, 2
    %v119 = vadd.f32 %v117, %v118
    %v120 = vrot.slane %v119, 1
    %v121 = vadd.f32 %v119, %v120
    %v122 = vrcp.pop 8.0
    %v123 = vmul.f32 8.0, %v122
    %v124 = vsub.f32 1.0, %v123
    %v125 = vmul.f32 %v122, %v124
    %v126 = vadd.f32 %v122, %v125
    %vm127 = vweird.f32 %v122
    %v128 = vsel %vm127, %v122, %v126
    %v129 = vmul.f32 %v121, %v128
    %v130 = vmul.f32 %v111, %v111
    %v131 = vrot.slane %v130, 4
    %v132 = vadd.f32 %v130, %v131
    %v133 = vrot.slane %v132, 2
    %v134 = vadd.f32 %v132, %v133
    %v135 = vrot.slane %v134, 1
    %v136 = vadd.f32 %v134, %v135
    %v137 = vmul.f32 %v136, %v128
    %v138 = vmul.f32 %v129, %v129
    %v139 = vsub.f32 %v137, %v138
    %v140 = vmax.f32 %v139, 0.0
    %v141 = vadd.f32 %v140, 1e-05
    %v142 = vrsqrt.pop %v141
    %v143 = vmul.f32 %v142, %v141
    %v144 = vmul.f32 %v143, %v142
    %v145 = vmul.f32 0.5, %v144
    %v146 = vsub.f32 1.5, %v145
    %v147 = vmul.f32 %v142, %v146
    %vm148 = vweird.f32 %v141
    %vm149 = vweird.f32 %v142
    %vm150 = vmor %vm148, %vm149
    %v151 = vsel %vm150, %v142, %v147
    %v152 = vmul.f32 %v114, %v151
    %v153 = vmul.f32 %v129, %v152
    %v154 = vsub.f32 %v115, %v153
    %v155 = vperm.slane %v152, 0
    %v156 = vmul.f32 %v111, %v155
    %v157 = vperm.slane %v154, 0
    %v158 = vadd.f32 %v156, %v157
    %vm159 = vcmp.gt.f32.partialorder %v158, 0.0
    %v160 = vmul.f32 %v158, 0.01
    %v161 = vsel %vm159, %v158, %v160
    %v162 = vpack.c.bf16 %v161, %v161
    %v163 = vld [vmem:[#allocation7] sm:$0xf]
    %v164 = vld [vmem:[#allocation7 + $0x4] sm:$0xf]
    %v165 = vld [vmem:[#allocation7 + $0x8] sm:$0xf]
    %v166 = vld [vmem:[#allocation7 + $0xc] sm:$0xf]
    %v167 = vld [vmem:[#allocation7 + $0x10] sm:$0xf]
    %v168 = vld [vmem:[#allocation7 + $0x14] sm:$0xf]
    %v169 = vld [vmem:[#allocation7 + $0x18] sm:$0xf]
    %v170 = vld [vmem:[#allocation7 + $0x1c] sm:$0xf]
    %v171 = vld [vmem:[#allocation7 + $0x20] sm:$0xf]
    %v172 = vld [vmem:[#allocation7 + $0x24] sm:$0xf]
    %v173 = vld [vmem:[#allocation7 + $0x28] sm:$0xf]
    %v174 = vld [vmem:[#allocation7 + $0x2c] sm:$0xf]
    %v175 = vld [vmem:[#allocation7 + $0x30] sm:$0xf]
    %v176 = vld [vmem:[#allocation7 + $0x34] sm:$0xf]
    %v177 = vld [vmem:[#allocation7 + $0x38] sm:$0xf]
    %v178 = vld [vmem:[#allocation7 + $0x3c] sm:$0xf]
    %v195 = vunpack.c.l.b16 %v163
    %v196 = vunpack.c.l.b16 %v164
    %v197 = vunpack.c.l.b16 %v165
    %v198 = vunpack.c.l.b16 %v166
    %v199 = vunpack.c.l.b16 %v167
    %v200 = vunpack.c.l.b16 %v168
    %v201 = vunpack.c.l.b16 %v169
    %v202 = vunpack.c.l.b16 %v170
    %v203 = vunpack.c.l.b16 %v171
    %v204 = vunpack.c.l.b16 %v172
    %v205 = vunpack.c.l.b16 %v173
    %v206 = vunpack.c.l.b16 %v174
    %v207 = vunpack.c.l.b16 %v175
    %v208 = vunpack.c.l.b16 %v176
    %v209 = vunpack.c.l.b16 %v177
    %v210 = vunpack.c.l.b16 %v178
    %v211 = vpack.c.b16 %v196, %v195
    %v212 = vpack.c.b16 %v198, %v197
    %v213 = vpack.c.b16 %v200, %v199
    %v214 = vpack.c.b16 %v202, %v201
    %v215 = vpack.c.b16 %v204, %v203
    %v216 = vpack.c.b16 %v206, %v205
    %v217 = vpack.c.b16 %v208, %v207
    %v218 = vpack.c.b16 %v210, %v209
    %227 = vmatpush.bf16.msra.mxu0 %v218
    %228 = vmatpush.bf16.msra.mxu0 %v217
    %229 = vmatpush.bf16.msra.mxu0 %v216
    %230 = vmatpush.bf16.msra.mxu0 %v215
    %231 = vmatpush.bf16.msra.mxu0 %v214
    %232 = vmatpush.bf16.msra.mxu0 %v213
    %233 = vmatpush.bf16.msra.mxu0 %v212
    %234 = vmatpush.bf16.msra.mxu0 %v211
    %235 = vmatmul.bf16.gmra.mxu0 %v162
    %v236 = vpop.f32.mrf.mxu0
    %v237 = vadd.f32 0.0, %v236
    %v238 = vpop.f32.mrf.mxu0
    %239 = vdwg.mxu0
    %v240 = vld [vmem:[#allocation8 + $0x2] sm:$0x1]
    %v241 = vld [vmem:[#allocation8 + $0x3] sm:$0x1]
    %v242 = vrot.slane %v237, 4
    %v243 = vadd.f32 %v237, %v242
    %v244 = vrot.slane %v243, 2
    %v245 = vadd.f32 %v243, %v244
    %v246 = vrot.slane %v245, 1
    %v247 = vadd.f32 %v245, %v246
    %v248 = vmul.f32 %v247, %v128
    %v249 = vmul.f32 %v237, %v237
    %v250 = vrot.slane %v249, 4
    %v251 = vadd.f32 %v249, %v250
    %v252 = vrot.slane %v251, 2
    %v253 = vadd.f32 %v251, %v252
    %v254 = vrot.slane %v253, 1
    %v255 = vadd.f32 %v253, %v254
    %v256 = vmul.f32 %v255, %v128
    %v257 = vmul.f32 %v248, %v248
    %v258 = vsub.f32 %v256, %v257
    %v259 = vmax.f32 %v258, 0.0
    %v260 = vadd.f32 %v259, 1e-05
    %v261 = vrsqrt.pop %v260
    %v262 = vmul.f32 %v261, %v260
    %v263 = vmul.f32 %v262, %v261
    %v264 = vmul.f32 0.5, %v263
    %v265 = vsub.f32 1.5, %v264
    %v266 = vmul.f32 %v261, %v265
    %vm267 = vweird.f32 %v260
    %vm268 = vweird.f32 %v261
    %vm269 = vmor %vm267, %vm268
    %v270 = vsel %vm269, %v261, %v266
    %v271 = vmul.f32 %v240, %v270
    %v272 = vmul.f32 %v248, %v271
    %v273 = vsub.f32 %v241, %v272
    %v274 = vperm.slane %v271, 0
    %v275 = vmul.f32 %v237, %v274
    %v276 = vperm.slane %v273, 0
    %v277 = vadd.f32 %v275, %v276
    %vm278 = vcmp.gt.f32.partialorder %v277, 0.0
    %v279 = vmul.f32 %v277, 0.01
    %v280 = vsel %vm278, %v277, %v279
    %v281 = vpack.c.bf16 %v280, %v280
    %s282 = scalar_lea.vmem [#allocation7], 64
    %v283 = vld [vmem:[%s282] sm:$0xf]
    %v284 = vld [vmem:[%s282 + $0x4] sm:$0xf]
    %v285 = vld [vmem:[%s282 + $0x8] sm:$0xf]
    %v286 = vld [vmem:[%s282 + $0xc] sm:$0xf]
    %v287 = vld [vmem:[%s282 + $0x10] sm:$0xf]
    %v288 = vld [vmem:[%s282 + $0x14] sm:$0xf]
    %v289 = vld [vmem:[%s282 + $0x18] sm:$0xf]
    %v290 = vld [vmem:[%s282 + $0x1c] sm:$0xf]
    %v291 = vld [vmem:[%s282 + $0x20] sm:$0xf]
    %v292 = vld [vmem:[%s282 + $0x24] sm:$0xf]
    %v293 = vld [vmem:[%s282 + $0x28] sm:$0xf]
    %v294 = vld [vmem:[%s282 + $0x2c] sm:$0xf]
    %v295 = vld [vmem:[%s282 + $0x30] sm:$0xf]
    %v296 = vld [vmem:[%s282 + $0x34] sm:$0xf]
    %v297 = vld [vmem:[%s282 + $0x38] sm:$0xf]
    %v298 = vld [vmem:[%s282 + $0x3c] sm:$0xf]
    %v315 = vunpack.c.l.b16 %v283
    %v316 = vunpack.c.l.b16 %v284
    %v317 = vunpack.c.l.b16 %v285
    %v318 = vunpack.c.l.b16 %v286
    %v319 = vunpack.c.l.b16 %v287
    %v320 = vunpack.c.l.b16 %v288
    %v321 = vunpack.c.l.b16 %v289
    %v322 = vunpack.c.l.b16 %v290
    %v323 = vunpack.c.l.b16 %v291
    %v324 = vunpack.c.l.b16 %v292
    %v325 = vunpack.c.l.b16 %v293
    %v326 = vunpack.c.l.b16 %v294
    %v327 = vunpack.c.l.b16 %v295
    %v328 = vunpack.c.l.b16 %v296
    %v329 = vunpack.c.l.b16 %v297
    %v330 = vunpack.c.l.b16 %v298
    %v331 = vpack.c.b16 %v316, %v315
    %v332 = vpack.c.b16 %v318, %v317
    %v333 = vpack.c.b16 %v320, %v319
    %v334 = vpack.c.b16 %v322, %v321
    %v335 = vpack.c.b16 %v324, %v323
    %v336 = vpack.c.b16 %v326, %v325
    %v337 = vpack.c.b16 %v328, %v327
    %v338 = vpack.c.b16 %v330, %v329
    %347 = vmatpush.bf16.msra.mxu0 %v338
    %348 = vmatpush.bf16.msra.mxu0 %v337
    %349 = vmatpush.bf16.msra.mxu0 %v336
    %350 = vmatpush.bf16.msra.mxu0 %v335
    %351 = vmatpush.bf16.msra.mxu0 %v334
    %352 = vmatpush.bf16.msra.mxu0 %v333
    %353 = vmatpush.bf16.msra.mxu0 %v332
    %354 = vmatpush.bf16.msra.mxu0 %v331
    %355 = vmatmul.bf16.gmra.mxu0 %v281
    %v356 = vpop.f32.mrf.mxu0
    %v357 = vadd.f32 0.0, %v356
    %v358 = vpop.f32.mrf.mxu0
    %359 = vdwg.mxu0
    %v360 = vld [vmem:[#allocation8 + $0x4] sm:$0x1]
    %v361 = vld [vmem:[#allocation8 + $0x5] sm:$0x1]
    %v362 = vrot.slane %v357, 4
    %v363 = vadd.f32 %v357, %v362
    %v364 = vrot.slane %v363, 2
    %v365 = vadd.f32 %v363, %v364
    %v366 = vrot.slane %v365, 1
    %v367 = vadd.f32 %v365, %v366
    %v368 = vmul.f32 %v367, %v128
    %v369 = vmul.f32 %v357, %v357
    %v370 = vrot.slane %v369, 4
    %v371 = vadd.f32 %v369, %v370
    %v372 = vrot.slane %v371, 2
    %v373 = vadd.f32 %v371, %v372
    %v374 = vrot.slane %v373, 1
    %v375 = vadd.f32 %v373, %v374
    %v376 = vmul.f32 %v375, %v128
    %v377 = vmul.f32 %v368, %v368
    %v378 = vsub.f32 %v376, %v377
    %v379 = vmax.f32 %v378, 0.0
    %v380 = vadd.f32 %v379, 1e-05
    %v381 = vrsqrt.pop %v380
    %v382 = vmul.f32 %v381, %v380
    %v383 = vmul.f32 %v382, %v381
    %v384 = vmul.f32 0.5, %v383
    %v385 = vsub.f32 1.5, %v384
    %v386 = vmul.f32 %v381, %v385
    %vm387 = vweird.f32 %v380
    %vm388 = vweird.f32 %v381
    %vm389 = vmor %vm387, %vm388
    %v390 = vsel %vm389, %v381, %v386
    %v391 = vmul.f32 %v360, %v390
    %v392 = vmul.f32 %v368, %v391
    %v393 = vsub.f32 %v361, %v392
    %v394 = vperm.slane %v391, 0
    %v395 = vmul.f32 %v357, %v394
    %v396 = vperm.slane %v393, 0
    %v397 = vadd.f32 %v395, %v396
    %vm398 = vcmp.gt.f32.partialorder %v397, 0.0
    %v399 = vmul.f32 %v397, 0.01
    %v400 = vsel %vm398, %v397, %v399
    %v401 = vpack.c.bf16 %v400, %v400
    %s402 = scalar_lea.vmem [#allocation7], 128
    %v403 = vld [vmem:[%s402] sm:$0xf]
    %v404 = vld [vmem:[%s402 + $0x4] sm:$0xf]
    %v405 = vld [vmem:[%s402 + $0x8] sm:$0xf]
    %v406 = vld [vmem:[%s402 + $0xc] sm:$0xf]
    %v407 = vld [vmem:[%s402 + $0x10] sm:$0xf]
    %v408 = vld [vmem:[%s402 + $0x14] sm:$0xf]
    %v409 = vld [vmem:[%s402 + $0x18] sm:$0xf]
    %v410 = vld [vmem:[%s402 + $0x1c] sm:$0xf]
    %v411 = vld [vmem:[%s402 + $0x20] sm:$0xf]
    %v412 = vld [vmem:[%s402 + $0x24] sm:$0xf]
    %v413 = vld [vmem:[%s402 + $0x28] sm:$0xf]
    %v414 = vld [vmem:[%s402 + $0x2c] sm:$0xf]
    %v415 = vld [vmem:[%s402 + $0x30] sm:$0xf]
    %v416 = vld [vmem:[%s402 + $0x34] sm:$0xf]
    %v417 = vld [vmem:[%s402 + $0x38] sm:$0xf]
    %v418 = vld [vmem:[%s402 + $0x3c] sm:$0xf]
    %v435 = vunpack.c.l.b16 %v403
    %v436 = vunpack.c.l.b16 %v404
    %v437 = vunpack.c.l.b16 %v405
    %v438 = vunpack.c.l.b16 %v406
    %v439 = vunpack.c.l.b16 %v407
    %v440 = vunpack.c.l.b16 %v408
    %v441 = vunpack.c.l.b16 %v409
    %v442 = vunpack.c.l.b16 %v410
    %v443 = vunpack.c.l.b16 %v411
    %v444 = vunpack.c.l.b16 %v412
    %v445 = vunpack.c.l.b16 %v413
    %v446 = vunpack.c.l.b16 %v414
    %v447 = vunpack.c.l.b16 %v415
    %v448 = vunpack.c.l.b16 %v416
    %v449 = vunpack.c.l.b16 %v417
    %v450 = vunpack.c.l.b16 %v418
    %v451 = vpack.c.b16 %v436, %v435
    %v452 = vpack.c.b16 %v438, %v437
    %v453 = vpack.c.b16 %v440, %v439
    %v454 = vpack.c.b16 %v442, %v441
    %v455 = vpack.c.b16 %v444, %v443
    %v456 = vpack.c.b16 %v446, %v445
    %v457 = vpack.c.b16 %v448, %v447
    %v458 = vpack.c.b16 %v450, %v449
    %467 = vmatpush.bf16.msra.mxu0 %v458
    %468 = vmatpush.bf16.msra.mxu0 %v457
    %469 = vmatpush.bf16.msra.mxu0 %v456
    %470 = vmatpush.bf16.msra.mxu0 %v455
    %471 = vmatpush.bf16.msra.mxu0 %v454
    %472 = vmatpush.bf16.msra.mxu0 %v453
    %473 = vmatpush.bf16.msra.mxu0 %v452
    %474 = vmatpush.bf16.msra.mxu0 %v451
    %475 = vmatmul.bf16.gmra.mxu0 %v401
    %v476 = vpop.f32.mrf.mxu0
    %v477 = vadd.f32 0.0, %v476
    %v478 = vpop.f32.mrf.mxu0
    %479 = vdwg.mxu0
    %v480 = vld [vmem:[#allocation8 + $0x6] sm:$0x1]
    %v481 = vld [vmem:[#allocation8 + $0x7] sm:$0x1]
    %v482 = vrot.slane %v477, 4
    %v483 = vadd.f32 %v477, %v482
    %v484 = vrot.slane %v483, 2
    %v485 = vadd.f32 %v483, %v484
    %v486 = vrot.slane %v485, 1
    %v487 = vadd.f32 %v485, %v486
    %v488 = vmul.f32 %v487, %v128
    %v489 = vmul.f32 %v477, %v477
    %v490 = vrot.slane %v489, 4
    %v491 = vadd.f32 %v489, %v490
    %v492 = vrot.slane %v491, 2
    %v493 = vadd.f32 %v491, %v492
    %v494 = vrot.slane %v493, 1
    %v495 = vadd.f32 %v493, %v494
    %v496 = vmul.f32 %v495, %v128
    %v497 = vmul.f32 %v488, %v488
    %v498 = vsub.f32 %v496, %v497
    %v499 = vmax.f32 %v498, 0.0
    %v500 = vadd.f32 %v499, 1e-05
    %v501 = vrsqrt.pop %v500
    %v502 = vmul.f32 %v501, %v500
    %v503 = vmul.f32 %v502, %v501
    %v504 = vmul.f32 0.5, %v503
    %v505 = vsub.f32 1.5, %v504
    %v506 = vmul.f32 %v501, %v505
    %vm507 = vweird.f32 %v500
    %vm508 = vweird.f32 %v501
    %vm509 = vmor %vm507, %vm508
    %v510 = vsel %vm509, %v501, %v506
    %v511 = vmul.f32 %v480, %v510
    %v512 = vmul.f32 %v488, %v511
    %v513 = vsub.f32 %v481, %v512
    %v514 = vperm.slane %v511, 0
    %v515 = vmul.f32 %v477, %v514
    %v516 = vperm.slane %v513, 0
    %v517 = vadd.f32 %v515, %v516
    %vm518 = vcmp.gt.f32.partialorder %v517, 0.0
    %v519 = vmul.f32 %v517, 0.01
    %v520 = vsel %vm518, %v517, %v519
    %v521 = vpack.c.bf16 %v520, %v520
    %s522 = scalar_lea.vmem [#allocation7], 192
    %v523 = vld [vmem:[%s522] sm:$0xf]
    %v524 = vld [vmem:[%s522 + $0x4] sm:$0xf]
    %v525 = vld [vmem:[%s522 + $0x8] sm:$0xf]
    %v526 = vld [vmem:[%s522 + $0xc] sm:$0xf]
    %v527 = vld [vmem:[%s522 + $0x10] sm:$0xf]
    %v528 = vld [vmem:[%s522 + $0x14] sm:$0xf]
    %v529 = vld [vmem:[%s522 + $0x18] sm:$0xf]
    %v530 = vld [vmem:[%s522 + $0x1c] sm:$0xf]
    %v531 = vld [vmem:[%s522 + $0x20] sm:$0xf]
    %v532 = vld [vmem:[%s522 + $0x24] sm:$0xf]
    %v533 = vld [vmem:[%s522 + $0x28] sm:$0xf]
    %v534 = vld [vmem:[%s522 + $0x2c] sm:$0xf]
    %v535 = vld [vmem:[%s522 + $0x30] sm:$0xf]
    %v536 = vld [vmem:[%s522 + $0x34] sm:$0xf]
    %v537 = vld [vmem:[%s522 + $0x38] sm:$0xf]
    %v538 = vld [vmem:[%s522 + $0x3c] sm:$0xf]
    %v539 = vld [vmem:[#allocation8 + $0x8] sm:$0x1]
    %v540 = vperm.slane %v539, 0
    %v557 = vunpack.c.l.b16 %v523
    %v558 = vunpack.c.l.b16 %v524
    %v559 = vunpack.c.l.b16 %v525
    %v560 = vunpack.c.l.b16 %v526
    %v561 = vunpack.c.l.b16 %v527
    %v562 = vunpack.c.l.b16 %v528
    %v563 = vunpack.c.l.b16 %v529
    %v564 = vunpack.c.l.b16 %v530
    %v565 = vunpack.c.l.b16 %v531
    %v566 = vunpack.c.l.b16 %v532
    %v567 = vunpack.c.l.b16 %v533
    %v568 = vunpack.c.l.b16 %v534
    %v569 = vunpack.c.l.b16 %v535
    %v570 = vunpack.c.l.b16 %v536
    %v571 = vunpack.c.l.b16 %v537
    %v572 = vunpack.c.l.b16 %v538
    %v573 = vpack.c.b16 %v558, %v557
    %v574 = vpack.c.b16 %v560, %v559
    %v575 = vpack.c.b16 %v562, %v561
    %v576 = vpack.c.b16 %v564, %v563
    %v577 = vpack.c.b16 %v566, %v565
    %v578 = vpack.c.b16 %v568, %v567
    %v579 = vpack.c.b16 %v570, %v569
    %v580 = vpack.c.b16 %v572, %v571
    %589 = vmatpush.bf16.msra.mxu0 %v580
    %590 = vmatpush.bf16.msra.mxu0 %v579
    %591 = vmatpush.bf16.msra.mxu0 %v578
    %592 = vmatpush.bf16.msra.mxu0 %v577
    %593 = vmatpush.bf16.msra.mxu0 %v576
    %594 = vmatpush.bf16.msra.mxu0 %v575
    %595 = vmatpush.bf16.msra.mxu0 %v574
    %596 = vmatpush.bf16.msra.mxu0 %v573
    %597 = vmatmul.bf16.gmra.mxu0 %v521
    %v598 = vpop.f32.mrf.mxu0
    %v599 = vadd.f32 %v540, %v598
    %v600 = vpop.f32.mrf.mxu0
    %601 = vdwg.mxu0
    %v602 = vxor.u32 %v599, 2147483648
    %v603 = vmul.f32 %v602, 1.442695
    %v604 = vpow.pop %v603
    %v605 = vadd.f32 %v604, 1.0
    %v606 = vrcp.pop %v605
    %v607 = vmul.f32 %v605, %v606
    %v608 = vsub.f32 1.0, %v607
    %v609 = vmul.f32 %v606, %v608
    %v610 = vadd.f32 %v606, %v609
    %vm611 = vweird.f32 %v605
    %vm612 = vweird.f32 %v606
    %vm613 = vmor %vm611, %vm612
    %v614 = vsel %vm613, %v606, %v610
    %v615 = vand.u32 2147483647, %v605
    %vm616 = vcmp.eq.f32.partialorder %v615, 8.507059e+37
    %v617 = vand.u32 %v605, 2147483648
    %v618 = vor.u32 1.1754944e-38, %v617
    %v619 = vsel %vm616, %v618, %v614
    %v620 = vmul.f32 1.0, %v619
    %621 = vst [vmem:[#allocation10] sm:$0xff] %v620
    // Predicated region
    $region34: #{tpu_custom_call.1} parent=1 // pred_check
      _
    $region35: #{tpu_custom_call.1} parent=1 // pred_check_branch
      %623 = sbr.rel (0) target = $region37
    $region36: #{tpu_custom_call.1} parent=1 // pred_region
      %625 = vsyncadd [#allocation4], 0
      %s627 = sshll.u32 [#allocation10], 4
      %s628 = int_to_ptr.vmem [resolvable:$true] %s627
      %s629 = sshll.u32 %s4, 4
      %s630 = int_to_ptr.hbm [resolvable:$true] %s629
      %632 = dma.vmem_to_hbm [thread:$0]  %s628, 128, %s630, [#allocation4]
    $region37: #{tpu_custom_call.1} parent=1 // pred_fallthru
      _
    // Predicated region
    $region38: #{tpu_custom_call.1} parent=1 // pred_check
      _
    $region39: #{tpu_custom_call.1} parent=1 // pred_check_branch
      %634 = sbr.rel (0) target = $region41
    $region40: #{tpu_custom_call.1} parent=1 // pred_region
      %636 = dma.done [#allocation4], 128
    $region41: #{tpu_custom_call.1} parent=1 // pred_fallthru
      _
    %637 = vsyncpa [#allocation3], 1
    %638 = vsyncpa [#allocation6], 1
    %639 = vsyncpa [#allocation9], 1
    %640 = vsyncpa [#allocation4], 1

</llo_original>
